<compile_context>
chip_gen: v6e
topology: v6e:2x2x1
jax: 0.10.0
libtpu: 0.0.40
codegen_flags: <defaults>
</compile_context>

<pallas_src>
import jax
import jax.numpy as jnp
from jax.experimental import pallas as pl
from jax.experimental.pallas import tpu as pltpu


def _round_up(x, m):
    return ((x + m - 1) // m) * m


def _mlp_kernel(x_ref, w1_ref, b1_ref, w2_ref, b2_ref, w3_ref, b3_ref, o_ref):
    """One batch tile: x [tB, Np] f32 -> o [1, tB] f32 (batch on the lane axis)."""
    x = x_ref[...]                                    # f32 [tB, Np]

    # Layer 1: Linear + ReLU (bf16 MXU operands, f32 accumulation + elementwise).
    h1 = jnp.dot(x.astype(jnp.bfloat16), w1_ref[...],
                 preferred_element_type=jnp.float32)
    h1 = jnp.maximum(h1 + b1_ref[...], 0.0)           # f32 [tB, Np]

    # Layer 2: Linear + ReLU.
    h2 = jnp.dot(h1.astype(jnp.bfloat16), w2_ref[...],
                 preferred_element_type=jnp.float32)
    h2 = jnp.maximum(h2 + b2_ref[...], 0.0)           # f32 [tB, Np]

    # Layer 3: Linear(Np,1) + sigmoid as a trans-B contraction against h2's
    # feature axis. w3_ref is an [8, Np] sublane-aligned row block (row 0 holds
    # the weights, rows 1..7 are zero), so the result comes out with batch on
    # the lane axis: [8, tB]; row 0 is the logits row -> lane-dense store.
    l3 = jax.lax.dot_general(
        w3_ref[...], h2,
        dimension_numbers=(((1,), (1,)), ((), ())),
        preferred_element_type=jnp.float32)           # f32 [8, tB]
    logits = l3[0:1, :] + b3_ref[0]                   # f32 [1, tB]
    o_ref[...] = jax.nn.sigmoid(logits).astype(o_ref.dtype)


def prepare_params(params, matmul_dtype=jnp.bfloat16):
    """One-time parameter prep: transpose to [in,out], zero-pad the feature dim
    to a multiple of 128, cast the [N,N] matmul weights to bf16.
    Zero padding is mathematically inert: padded hidden units get zero weights
    and zero bias, stay 0 through ReLU, and contribute 0 downstream."""
    w1, b1, w2, b2, w3, b3 = params
    n = w1.shape[0]
    n_pad = _round_up(max(n, 128), 128)
    pad2 = lambda a, r, c: jnp.pad(a, ((0, r - a.shape[0]), (0, c - a.shape[1])))
    return dict(
        n=n,
        n_pad=n_pad,
        w1t=pad2(w1.T, n_pad, n_pad).astype(matmul_dtype),                 # [Np, Np]
        b1=jnp.pad(b1, (0, n_pad - n)).reshape(1, n_pad).astype(jnp.float32),
        w2t=pad2(w2.T, n_pad, n_pad).astype(matmul_dtype),                 # [Np, Np]
        b2=jnp.pad(b2, (0, n_pad - n)).reshape(1, n_pad).astype(jnp.float32),
        # PyTorch w3 is [1, N] -> sublane-aligned [8, Np] row block (rows 1..7 zero).
        w3=pad2(w3.astype(jnp.float32), 8, n_pad),                         # [8, Np]
        b3=b3.reshape(1).astype(jnp.float32),                              # [1] SMEM scalar
    )


def neural_network_stat_forward(x, prep, *, max_batch_tile=256):
    """Fused forward. x: [B, N] float32 -> [B, 1] float32 (sigmoid probs)."""
    b, n = x.shape
    assert n == prep["n"], f"feature dim mismatch: {n} vs {prep['n']}"
    n_pad = prep["n_pad"]

    # Batch tile: multiple of 8 sublanes, capped so resident weights plus
    # double-buffered x tiles stay well inside v7x's 64 MiB VMEM.
    tb = min(max_batch_tile, _round_up(b, 8))
    b_pad = _round_up(b, tb)
    num_tiles = b_pad // tb

    x_pad = jnp.pad(x.astype(jnp.float32), ((0, b_pad - b), (0, n_pad - n)))

    flops = 4 * b_pad * n_pad * n_pad + 16 * b_pad * n_pad
    bytes_accessed = (x_pad.size * 4 + prep["w1t"].size * 2 + prep["w2t"].size * 2
                      + prep["w3"].size * 4 + 2 * n_pad * 4 + b_pad * 4)

    out = pl.pallas_call(
        _mlp_kernel,
        out_shape=jax.ShapeDtypeStruct((1, b_pad), jnp.float32),
        grid=(num_tiles,),
        in_specs=[
            pl.BlockSpec((tb, n_pad), lambda i: (i, 0)),        # x tile (pipelined)
            pl.BlockSpec((n_pad, n_pad), lambda i: (0, 0)),     # w1^T (VMEM-resident)
            pl.BlockSpec((1, n_pad), lambda i: (0, 0)),         # b1
            pl.BlockSpec((n_pad, n_pad), lambda i: (0, 0)),     # w2^T (VMEM-resident)
            pl.BlockSpec((1, n_pad), lambda i: (0, 0)),         # b2
            pl.BlockSpec((8, n_pad), lambda i: (0, 0)),         # w3 row block
            pl.BlockSpec(memory_space=pltpu.MemorySpace.SMEM),  # b3 scalar
        ],
        out_specs=pl.BlockSpec((1, tb), lambda i: (0, i)),      # lane-dense output
        compiler_params=pltpu.CompilerParams(
            dimension_semantics=("parallel",)),                 # megacore on v7x
        cost_estimate=pl.CostEstimate(
            flops=int(flops), transcendentals=int(b_pad),
            bytes_accessed=int(bytes_accessed)),
    )(x_pad, prep["w1t"], prep["b1"], prep["w2t"], prep["b2"],
      prep["w3"], prep["b3"])

    return out[0, :b].reshape(b, 1)


def init_params(key, N):
    """Deterministic PyTorch-nn.Linear-style init (uniform ±1/sqrt(fan_in))."""
    ks = jax.random.split(key, 6)
    bound = 1.0 / jnp.sqrt(N)
    w1 = jax.random.uniform(ks[0], (N, N), jnp.float32, -bound, bound)
    b1 = jax.random.uniform(ks[1], (N,), jnp.float32, -bound, bound)
    w2 = jax.random.uniform(ks[2], (N, N), jnp.float32, -bound, bound)
    b2 = jax.random.uniform(ks[3], (N,), jnp.float32, -bound, bound)
    w3 = jax.random.uniform(ks[4], (1, N), jnp.float32, -bound, bound)
    b3 = jax.random.uniform(ks[5], (1,), jnp.float32, -bound, bound)
    return (w1, b1, w2, b2, w3, b3)


if __name__ == "__main__":
    key = jax.random.PRNGKey(0)
    k_x, k_p = jax.random.split(key)

    B, N = 8, 32
    x = jax.random.normal(k_x, (B, N), dtype=jnp.float32)
    raw_params = init_params(k_p, N)
    prep = prepare_params(raw_params)     # one-time: transpose / pad / bf16 cast

    out = neural_network_stat_forward(x, prep)
    out = jax.block_until_ready(out)
    assert out.shape == (B, 1)

    # Reference with identical math (padded params, bf16 matmul operands,
    # f32 accumulation) -> tight tolerance validates the kernel itself.
    n_pad = prep["n_pad"]
    xp = jnp.pad(x, ((0, 0), (0, n_pad - N)))
    h1 = jnp.maximum(jnp.dot(xp.astype(jnp.bfloat16), prep["w1t"],
                             preferred_element_type=jnp.float32) + prep["b1"], 0.0)
    h2 = jnp.maximum(jnp.dot(h1.astype(jnp.bfloat16), prep["w2t"],
                             preferred_element_type=jnp.float32) + prep["b2"], 0.0)
    logits = jnp.sum(h2 * prep["w3"][0:1], axis=-1, keepdims=True) + prep["b3"][0]
    ref = jax.nn.sigmoid(logits)
    assert jnp.allclose(out, ref, atol=1e-3), "mismatch vs matched reference"

    # Loose sanity check against the original full-f32 module math
    # (difference only from the intentional bf16 weight quantization).
    w1, b1, w2, b2, w3, b3 = raw_params
    ref_f32 = jax.nn.sigmoid(
        jnp.maximum(jnp.maximum(x @ w1.T + b1, 0.0) @ w2.T + b2, 0.0) @ w3.T + b3)
    assert jnp.allclose(out, ref_f32, atol=5e-2), "mismatch vs f32 module math"

    print("KERNEL_OK")
</pallas_src>

<mosaic_0001>
module attributes {stable_mosaic.version = 11 : i64} {
  func.func @_mlp_kernel(%arg0: i32, %arg1: memref<8x128xf32, #tpu.memory_space<vmem>>, %arg2: memref<128x128xbf16, #tpu.memory_space<vmem>>, %arg3: memref<1x128xf32, #tpu.memory_space<vmem>>, %arg4: memref<128x128xbf16, #tpu.memory_space<vmem>>, %arg5: memref<1x128xf32, #tpu.memory_space<vmem>>, %arg6: memref<8x128xf32, #tpu.memory_space<vmem>>, %arg7: memref<1xf32, #tpu.memory_space<smem>>, %arg8: memref<1x8xf32, #tpu.memory_space<vmem>>) attributes {dimension_semantics = [#tpu.dimension_semantics<parallel>], iteration_bounds = array<i64: 1>, scalar_prefetch = 0 : i64, scratch_operands = 0 : i64, tpu.core_type = #tpu.core_type<tc>, window_params = [{transform_indices = @transform_0, window_bounds = array<i64: 8, 128>}, {pipeline_mode = #tpu.pipeline_mode<synchronous>, transform_indices = @transform_1, window_bounds = array<i64: 128, 128>}, {pipeline_mode = #tpu.pipeline_mode<synchronous>, transform_indices = @transform_2, window_bounds = array<i64: 1, 128>}, {pipeline_mode = #tpu.pipeline_mode<synchronous>, transform_indices = @transform_3, window_bounds = array<i64: 128, 128>}, {pipeline_mode = #tpu.pipeline_mode<synchronous>, transform_indices = @transform_4, window_bounds = array<i64: 1, 128>}, {pipeline_mode = #tpu.pipeline_mode<synchronous>, transform_indices = @transform_5, window_bounds = array<i64: 8, 128>}, {transform_indices = @transform_6, window_bounds = array<i64: 1>}, {transform_indices = @transform_7, window_bounds = array<i64: 1, 8>}]} {
    %c0 = arith.constant 0 : index
    %c0_0 = arith.constant 0 : index
    %0 = vector.load %arg1[%c0, %c0_0] : memref<8x128xf32, #tpu.memory_space<vmem>>, vector<8x128xf32>
    %1 = arith.truncf %0 : vector<8x128xf32> to vector<8x128xbf16>
    %c0_1 = arith.constant 0 : index
    %c0_2 = arith.constant 0 : index
    %2 = vector.load %arg2[%c0_1, %c0_2] : memref<128x128xbf16, #tpu.memory_space<vmem>>, vector<128x128xbf16>
    %cst = arith.constant dense<0.000000e+00> : vector<8x128xf32>
    %3 = tpu.matmul %1, %2, %cst {dimension_numbers = #tpu.dot_dimension_numbers<[1], [0], [0], [1], [0, 0, 1, 1], [], []>} : vector<8x128xbf16>, vector<128x128xbf16>, vector<8x128xf32> -> vector<8x128xf32>
    %c0_3 = arith.constant 0 : index
    %c0_4 = arith.constant 0 : index
    %4 = vector.load %arg3[%c0_3, %c0_4] : memref<1x128xf32, #tpu.memory_space<vmem>>, vector<1x128xf32>
    %5 = vector.broadcast %4 : vector<1x128xf32> to vector<8x128xf32>
    %6 = arith.addf %3, %5 : vector<8x128xf32>
    %cst_5 = arith.constant 0.000000e+00 : f32
    %7 = vector.broadcast %cst_5 : f32 to vector<8x128xf32>
    %8 = arith.maximumf %6, %7 : vector<8x128xf32>
    %9 = arith.truncf %8 : vector<8x128xf32> to vector<8x128xbf16>
    %c0_6 = arith.constant 0 : index
    %c0_7 = arith.constant 0 : index
    %10 = vector.load %arg4[%c0_6, %c0_7] : memref<128x128xbf16, #tpu.memory_space<vmem>>, vector<128x128xbf16>
    %cst_8 = arith.constant dense<0.000000e+00> : vector<8x128xf32>
    %11 = tpu.matmul %9, %10, %cst_8 {dimension_numbers = #tpu.dot_dimension_numbers<[1], [0], [0], [1], [0, 0, 1, 1], [], []>} : vector<8x128xbf16>, vector<128x128xbf16>, vector<8x128xf32> -> vector<8x128xf32>
    %c0_9 = arith.constant 0 : index
    %c0_10 = arith.constant 0 : index
    %12 = vector.load %arg5[%c0_9, %c0_10] : memref<1x128xf32, #tpu.memory_space<vmem>>, vector<1x128xf32>
    %13 = vector.broadcast %12 : vector<1x128xf32> to vector<8x128xf32>
    %14 = arith.addf %11, %13 : vector<8x128xf32>
    %cst_11 = arith.constant 0.000000e+00 : f32
    %15 = vector.broadcast %cst_11 : f32 to vector<8x128xf32>
    %16 = arith.maximumf %14, %15 : vector<8x128xf32>
    %c0_12 = arith.constant 0 : index
    %c0_13 = arith.constant 0 : index
    %17 = vector.load %arg6[%c0_12, %c0_13] : memref<8x128xf32, #tpu.memory_space<vmem>>, vector<8x128xf32>
    %cst_14 = arith.constant dense<0.000000e+00> : vector<8x8xf32>
    %18 = tpu.matmul %17, %16, %cst_14 {dimension_numbers = #tpu.dot_dimension_numbers<[1], [1], [0], [0], [0, 0, 1, 0], [], []>} : vector<8x128xf32>, vector<8x128xf32>, vector<8x8xf32> -> vector<8x8xf32>
    %19 = vector.extract_strided_slice %18 {offsets = [0, 0], sizes = [1, 8], strides = [1, 1]} : vector<8x8xf32> to vector<1x8xf32>
    %c0_15 = arith.constant 0 : index
    %20 = memref.load %arg7[%c0_15] : memref<1xf32, #tpu.memory_space<smem>>
    %21 = vector.broadcast %20 : f32 to vector<1x8xf32>
    %22 = arith.addf %19, %21 : vector<1x8xf32>
    %23 = arith.negf %22 : vector<1x8xf32>
    %24 = math.exp %23 : vector<1x8xf32>
    %cst_16 = arith.constant 1.000000e+00 : f32
    %25 = vector.broadcast %cst_16 : f32 to vector<1x8xf32>
    %26 = arith.addf %25, %24 : vector<1x8xf32>
    %27 = arith.divf %25, %26 : vector<1x8xf32>
    %c0_17 = arith.constant 0 : index
    %c0_18 = arith.constant 0 : index
    %28 = vector.load %arg8[%c0_17, %c0_18] : memref<1x8xf32, #tpu.memory_space<vmem>>, vector<1x8xf32>
    tpu.vector_store %arg8[%c0_17, %c0_18], %27 {strides = array<i32>} : memref<1x8xf32, #tpu.memory_space<vmem>>, vector<1x8xf32>,
    return
  }
  func.func @transform_0(%arg0: i32) -> (i32, i32) {
    %c0_i32 = arith.constant 0 : i32
    %c0_i32_0 = arith.constant 0 : i32
    return %arg0, %c0_i32 : i32, i32
  }
  func.func @transform_1(%arg0: i32) -> (i32, i32) {
    %c0_i32 = arith.constant 0 : i32
    %c0_i32_0 = arith.constant 0 : i32
    %c0_i32_1 = arith.constant 0 : i32
    return %c0_i32, %c0_i32_0 : i32, i32
  }
  func.func @transform_2(%arg0: i32) -> (i32, i32) {
    %c0_i32 = arith.constant 0 : i32
    %c0_i32_0 = arith.constant 0 : i32
    %c0_i32_1 = arith.constant 0 : i32
    return %c0_i32, %c0_i32_0 : i32, i32
  }
  func.func @transform_3(%arg0: i32) -> (i32, i32) {
    %c0_i32 = arith.constant 0 : i32
    %c0_i32_0 = arith.constant 0 : i32
    %c0_i32_1 = arith.constant 0 : i32
    return %c0_i32, %c0_i32_0 : i32, i32
  }
  func.func @transform_4(%arg0: i32) -> (i32, i32) {
    %c0_i32 = arith.constant 0 : i32
    %c0_i32_0 = arith.constant 0 : i32
    %c0_i32_1 = arith.constant 0 : i32
    return %c0_i32, %c0_i32_0 : i32, i32
  }
  func.func @transform_5(%arg0: i32) -> (i32, i32) {
    %c0_i32 = arith.constant 0 : i32
    %c0_i32_0 = arith.constant 0 : i32
    %c0_i32_1 = arith.constant 0 : i32
    return %c0_i32, %c0_i32_0 : i32, i32
  }
  func.func @transform_6(%arg0: i32) -> i32 {
    %c0_i32 = arith.constant 0 : i32
    %c0_i32_0 = arith.constant 0 : i32
    return %c0_i32 : i32
  }
  func.func @transform_7(%arg0: i32) -> (i32, i32) {
    %c0_i32 = arith.constant 0 : i32
    %c0_i32_0 = arith.constant 0 : i32
    return %c0_i32, %arg0 : i32, i32
  }
}

</mosaic_0001>

<llo_original>
// kernel: tpu_custom_call.1
$region0: #{tpu_custom_call.1}
  #allocation0 [shape = 'u32[]', space=smem, size = 0x4, offset = 0x4, fixed_abs, tag = 'smem constant byte address 0x4 - core index']
  #allocation1 [shape = 'u32[144,128]{1,0:T(1,128)}', space=vmem, size = 0x12000, scoped, tag = 'internal scratch']
  #allocation2 [shape = 'f32[1]{0:T(128)S(6)}', space=smem, size = 0x200, scoped, tag = 'scoped memory for tpu_custom_call.1']
  %s0 = inlined_call_operand.hbm [shape: f32[8,128], index: 0, kind: input, shape index: {}]
  %s1 = inlined_call_operand.hbm [shape: bf16[128,128], index: 1, kind: input, shape index: {}]
  %s2 = inlined_call_operand.vmem [shape: f32[1,128], index: 2, kind: input, shape index: {}]
  %s3 = inlined_call_operand.hbm [shape: bf16[128,128], index: 3, kind: input, shape index: {}]
  %s4 = inlined_call_operand.vmem [shape: f32[1,128], index: 4, kind: input, shape index: {}]
  %s5 = inlined_call_operand.vmem [shape: f32[8,128], index: 5, kind: input, shape index: {}]
  %s6 = inlined_call_operand.<no memory space> [shape: f32[1], index: 6, kind: input, shape index: {}]
  %s7 = inlined_call_operand.hbm [shape: f32[1,8], index: 7, kind: output, shape index: {}]
  %s8 = sld [smem:[#allocation0]]
  $region50: #{tpu_custom_call.1} parent=0
    _
  %s10 = ssub.s32 1, %s8
  %s11 = scalar_select 0, %s10, %s8
  %12 = sst [smem:[#allocation2]] %s6
  $region1: #{tpu_custom_call.1} parent=0
    #allocation3 [shape = 'u8[4096]{0}', space=vmem, size = 0x1000, scoped, tag = 'input window, operand 0, single buffered']
    #allocation4 [shape = 's32[1]{0}', space=sflag, size = 0x4, scoped, tag = 'scoped memory for tpu_custom_call.1']
    #allocation5 [shape = 's32[1]{0}', space=sflag, size = 0x4, scoped, tag = 'scoped memory for tpu_custom_call.1']
    #allocation6 [shape = 'u8[32768]{0}', space=vmem, size = 0x8000, scoped, tag = 'input window, operand 1, single buffered']
    #allocation7 [shape = 's32[1]{0}', space=sflag, size = 0x4, scoped, tag = 'scoped memory for tpu_custom_call.1']
    #allocation8 [shape = 'u8[32768]{0}', space=vmem, size = 0x8000, scoped, tag = 'input window, operand 3, single buffered']
    #allocation9 [shape = 'u8[512]{0}', space=vmem, size = 0x400, scoped, tag = 'output window, operand 0, single buffered']
    %13 = vsyncpa [#allocation4], 0
    %14 = vsyncpa [#allocation7], 0
    %15 = vsyncpa [#allocation5], 0
    // Predicated region
    $region2: #{tpu_custom_call.1} parent=1 // pred_check
      _
    $region3: #{tpu_custom_call.1} parent=1 // pred_check_branch
      %17 = sbr.rel (0) target = $region5
    $region4: #{tpu_custom_call.1} parent=1 // pred_region
      %s19 = ssub.s32 128, 128
      %20 = vsyncadd [#allocation4], %s19
      %s22 = sshll.u32 [#allocation3], 4
      %s23 = int_to_ptr.vmem [resolvable:$true] %s22
      %25 = dma.hbm_to_vmem [thread:$0]  %s0, 128, %s23, [#allocation4]
    $region5: #{tpu_custom_call.1} parent=1 // pred_fallthru
      _
    // Predicated region
    $region6: #{tpu_custom_call.1} parent=1 // pred_check
      _
    $region7: #{tpu_custom_call.1} parent=1 // pred_check_branch
      %27 = sbr.rel (0) target = $region9
    $region8: #{tpu_custom_call.1} parent=1 // pred_region
      %s29 = ssub.s32 1024, 1024
      %30 = vsyncadd [#allocation7], %s29
      %s31 = sshll.u32 [#allocation6], 4
      %s32 = int_to_ptr.vmem [resolvable:$true] %s31
      %37 = dma.hbm_to_vmem [thread:$0]  %s1, 1024, %s32, [#allocation7], 64, 64, 4
    $region9: #{tpu_custom_call.1} parent=1 // pred_fallthru
      _
    // Predicated region
    $region10: #{tpu_custom_call.1} parent=1 // pred_check
      _
    $region11: #{tpu_custom_call.1} parent=1 // pred_check_branch
      %39 = sbr.rel (0) target = $region13
    $region12: #{tpu_custom_call.1} parent=1 // pred_region
      _
    $region13: #{tpu_custom_call.1} parent=1 // pred_fallthru
      _
    // Predicated region
    $region14: #{tpu_custom_call.1} parent=1 // pred_check
      _
    $region15: #{tpu_custom_call.1} parent=1 // pred_check_branch
      %41 = sbr.rel (0) target = $region17
    $region16: #{tpu_custom_call.1} parent=1 // pred_region
      %s43 = ssub.s32 1024, 1024
      %44 = vsyncadd [#allocation7], %s43
      %s45 = sshll.u32 [#allocation8], 4
      %s46 = int_to_ptr.vmem [resolvable:$true] %s45
      %51 = dma.hbm_to_vmem [thread:$0]  %s3, 1024, %s46, [#allocation7], 64, 64, 4
    $region17: #{tpu_custom_call.1} parent=1 // pred_fallthru
      _
    // Predicated region
    $region18: #{tpu_custom_call.1} parent=1 // pred_check
      _
    $region19: #{tpu_custom_call.1} parent=1 // pred_check_branch
      %53 = sbr.rel (0) target = $region21
    $region20: #{tpu_custom_call.1} parent=1 // pred_region
      _
    $region21: #{tpu_custom_call.1} parent=1 // pred_fallthru
      _
    // Predicated region
    $region22: #{tpu_custom_call.1} parent=1 // pred_check
      _
    $region23: #{tpu_custom_call.1} parent=1 // pred_check_branch
      %55 = sbr.rel (0) target = $region25
    $region24: #{tpu_custom_call.1} parent=1 // pred_region
      _
    $region25: #{tpu_custom_call.1} parent=1 // pred_fallthru
      _
    // Predicated region
    $region26: #{tpu_custom_call.1} parent=1 // pred_check
      _
    $region27: #{tpu_custom_call.1} parent=1 // pred_check_branch
      %57 = sbr.rel (0) target = $region29
    $region28: #{tpu_custom_call.1} parent=1 // pred_region
      _
    $region29: #{tpu_custom_call.1} parent=1 // pred_fallthru
      _
    // Predicated region
    $region30: #{tpu_custom_call.1} parent=1 // pred_check
      _
    $region31: #{tpu_custom_call.1} parent=1 // pred_check_branch
      %59 = sbr.rel (0) target = $region33
    $region32: #{tpu_custom_call.1} parent=1 // pred_region
      %60 = dma.done [#allocation4], 128
    $region33: #{tpu_custom_call.1} parent=1 // pred_fallthru
      _
    // Predicated region
    $region34: #{tpu_custom_call.1} parent=1 // pred_check
      _
    $region35: #{tpu_custom_call.1} parent=1 // pred_check_branch
      %62 = sbr.rel (0) target = $region37
    $region36: #{tpu_custom_call.1} parent=1 // pred_region
      %63 = dma.done [#allocation7], 1024
    $region37: #{tpu_custom_call.1} parent=1 // pred_fallthru
      _
    // Predicated region
    $region38: #{tpu_custom_call.1} parent=1 // pred_check
      _
    $region39: #{tpu_custom_call.1} parent=1 // pred_check_branch
      %65 = sbr.rel (0) target = $region41
    $region40: #{tpu_custom_call.1} parent=1 // pred_region
      %66 = dma.done [#allocation7], 1024
    $region41: #{tpu_custom_call.1} parent=1 // pred_fallthru
      _
    %v68 = vld [vmem:[#allocation3] sm:$0xff]
    %v69 = vpack.c.bf16 %v68, %v68
    %v70 = vld [vmem:[#allocation6] sm:$0xf]
    %v71 = vld [vmem:[#allocation6 + $0x4] sm:$0xf]
    %v72 = vld [vmem:[#allocation6 + $0x8] sm:$0xf]
    %v73 = vld [vmem:[#allocation6 + $0xc] sm:$0xf]
    %v74 = vld [vmem:[#allocation6 + $0x10] sm:$0xf]
    %v75 = vld [vmem:[#allocation6 + $0x14] sm:$0xf]
    %v76 = vld [vmem:[#allocation6 + $0x18] sm:$0xf]
    %v77 = vld [vmem:[#allocation6 + $0x1c] sm:$0xf]
    %v78 = vld [vmem:[#allocation6 + $0x20] sm:$0xf]
    %v79 = vld [vmem:[#allocation6 + $0x24] sm:$0xf]
    %v80 = vld [vmem:[#allocation6 + $0x28] sm:$0xf]
    %v81 = vld [vmem:[#allocation6 + $0x2c] sm:$0xf]
    %v82 = vld [vmem:[#allocation6 + $0x30] sm:$0xf]
    %v83 = vld [vmem:[#allocation6 + $0x34] sm:$0xf]
    %v84 = vld [vmem:[#allocation6 + $0x38] sm:$0xf]
    %v85 = vld [vmem:[#allocation6 + $0x3c] sm:$0xf]
    %v86 = vld [vmem:[%s2] sm:$0x1]
    %v88 = vlaneseq
    %v89 = vshrl.u32 %v88, 7
    %v90 = vsub.s32 0, %v89
    %v91 = vrot.slane %v86, %v90
    %v109 = vunpack.c.l.b16 %v70
    %v110 = vunpack.c.l.b16 %v71
    %v111 = vunpack.c.l.b16 %v72
    %v112 = vunpack.c.l.b16 %v73
    %v113 = vunpack.c.l.b16 %v74
    %v114 = vunpack.c.l.b16 %v75
    %v115 = vunpack.c.l.b16 %v76
    %v116 = vunpack.c.l.b16 %v77
    %v117 = vunpack.c.l.b16 %v78
    %v118 = vunpack.c.l.b16 %v79
    %v119 = vunpack.c.l.b16 %v80
    %v120 = vunpack.c.l.b16 %v81
    %v121 = vunpack.c.l.b16 %v82
    %v122 = vunpack.c.l.b16 %v83
    %v123 = vunpack.c.l.b16 %v84
    %v124 = vunpack.c.l.b16 %v85
    %v125 = vpack.c.b16 %v110, %v109
    %v126 = vpack.c.b16 %v112, %v111
    %v127 = vpack.c.b16 %v114, %v113
    %v128 = vpack.c.b16 %v116, %v115
    %v129 = vpack.c.b16 %v118, %v117
    %v130 = vpack.c.b16 %v120, %v119
    %v131 = vpack.c.b16 %v122, %v121
    %v132 = vpack.c.b16 %v124, %v123
    %141 = vmatprep.subr.bf16.mxu0 0
    %142 = vmatpush1.bf16.msra.mxu0 %v132
    %143 = vmatprep.subr.bf16.mxu0 0
    %144 = vmatpush1.bf16.msra.mxu0 %v131
    %145 = vmatprep.subr.bf16.mxu0 0
    %146 = vmatpush1.bf16.msra.mxu0 %v130
    %147 = vmatprep.subr.bf16.mxu0 0
    %148 = vmatpush1.bf16.msra.mxu0 %v129
    %149 = vmatprep.subr.bf16.mxu0 0
    %150 = vmatpush1.bf16.msra.mxu0 %v128
    %151 = vmatprep.subr.bf16.mxu0 0
    %152 = vmatpush1.bf16.msra.mxu0 %v127
    %153 = vmatprep.subr.bf16.mxu0 0
    %154 = vmatpush1.bf16.msra.mxu0 %v126
    %155 = vmatprep.subr.bf16.mxu0 0
    %156 = vmatpush1.bf16.msra.mxu0 %v125
    %157 = vmatprep.subr.bf16.mxu0 0
    %158 = vmatpush2.bf16.msra.mxu0 0
    %159 = vmatprep.subr.bf16.mxu0 0
    %160 = vmatpush2.bf16.msra.mxu0 0
    %161 = vmatprep.subr.bf16.mxu0 0
    %162 = vmatpush2.bf16.msra.mxu0 0
    %163 = vmatprep.subr.bf16.mxu0 0
    %164 = vmatpush2.bf16.msra.mxu0 0
    %165 = vmatprep.subr.bf16.mxu0 0
    %166 = vmatpush2.bf16.msra.mxu0 0
    %167 = vmatprep.subr.bf16.mxu0 0
    %168 = vmatpush2.bf16.msra.mxu0 0
    %169 = vmatprep.subr.bf16.mxu0 0
    %170 = vmatpush2.bf16.msra.mxu0 0
    %171 = vmatprep.subr.bf16.mxu0 0
    %172 = vmatpush2.bf16.msra.mxu0 0
    %173 = vmatprep.mubr.bf16.mxu0 0
    %174 = vmatmul.mubr.bf16.gmra.mxu0 %v69
    %v175 = vpop.f32.mrf.mxu0
    %v176 = vadd.f32 %v91, %v175
    %v177 = vpop.f32.mrf.mxu0
    %v178 = vpop.f32.mrf.mxu0
    %v179 = vpop.f32.mrf.mxu0
    %180 = vdwg.mxu0
    %v181 = vmax.f32 %v176, 0.0
    %v182 = vpack.c.bf16 %v181, %v181
    %v183 = vld [vmem:[#allocation8] sm:$0xf]
    %v184 = vld [vmem:[#allocation8 + $0x4] sm:$0xf]
    %v185 = vld [vmem:[#allocation8 + $0x8] sm:$0xf]
    %v186 = vld [vmem:[#allocation8 + $0xc] sm:$0xf]
    %v187 = vld [vmem:[#allocation8 + $0x10] sm:$0xf]
    %v188 = vld [vmem:[#allocation8 + $0x14] sm:$0xf]
    %v189 = vld [vmem:[#allocation8 + $0x18] sm:$0xf]
    %v190 = vld [vmem:[#allocation8 + $0x1c] sm:$0xf]
    %v191 = vld [vmem:[#allocation8 + $0x20] sm:$0xf]
    %v192 = vld [vmem:[#allocation8 + $0x24] sm:$0xf]
    %v193 = vld [vmem:[#allocation8 + $0x28] sm:$0xf]
    %v194 = vld [vmem:[#allocation8 + $0x2c] sm:$0xf]
    %v195 = vld [vmem:[#allocation8 + $0x30] sm:$0xf]
    %v196 = vld [vmem:[#allocation8 + $0x34] sm:$0xf]
    %v197 = vld [vmem:[#allocation8 + $0x38] sm:$0xf]
    %v198 = vld [vmem:[#allocation8 + $0x3c] sm:$0xf]
    %v199 = vld [vmem:[%s4] sm:$0x1]
    %v201 = vlaneseq
    %v202 = vshrl.u32 %v201, 7
    %v203 = vsub.s32 0, %v202
    %v204 = vrot.slane %v199, %v203
    %v222 = vunpack.c.l.b16 %v183
    %v223 = vunpack.c.l.b16 %v184
    %v224 = vunpack.c.l.b16 %v185
    %v225 = vunpack.c.l.b16 %v186
    %v226 = vunpack.c.l.b16 %v187
    %v227 = vunpack.c.l.b16 %v188
    %v228 = vunpack.c.l.b16 %v189
    %v229 = vunpack.c.l.b16 %v190
    %v230 = vunpack.c.l.b16 %v191
    %v231 = vunpack.c.l.b16 %v192
    %v232 = vunpack.c.l.b16 %v193
    %v233 = vunpack.c.l.b16 %v194
    %v234 = vunpack.c.l.b16 %v195
    %v235 = vunpack.c.l.b16 %v196
    %v236 = vunpack.c.l.b16 %v197
    %v237 = vunpack.c.l.b16 %v198
    %v238 = vpack.c.b16 %v223, %v222
    %v239 = vpack.c.b16 %v225, %v224
    %v240 = vpack.c.b16 %v227, %v226
    %v241 = vpack.c.b16 %v229, %v228
    %v242 = vpack.c.b16 %v231, %v230
    %v243 = vpack.c.b16 %v233, %v232
    %v244 = vpack.c.b16 %v235, %v234
    %v245 = vpack.c.b16 %v237, %v236
    %254 = vmatprep.subr.bf16.mxu0 0
    %255 = vmatpush1.bf16.msra.mxu0 %v245
    %256 = vmatprep.subr.bf16.mxu0 0
    %257 = vmatpush1.bf16.msra.mxu0 %v244
    %258 = vmatprep.subr.bf16.mxu0 0
    %259 = vmatpush1.bf16.msra.mxu0 %v243
    %260 = vmatprep.subr.bf16.mxu0 0
    %261 = vmatpush1.bf16.msra.mxu0 %v242
    %262 = vmatprep.subr.bf16.mxu0 0
    %263 = vmatpush1.bf16.msra.mxu0 %v241
    %264 = vmatprep.subr.bf16.mxu0 0
    %265 = vmatpush1.bf16.msra.mxu0 %v240
    %266 = vmatprep.subr.bf16.mxu0 0
    %267 = vmatpush1.bf16.msra.mxu0 %v239
    %268 = vmatprep.subr.bf16.mxu0 0
    %269 = vmatpush1.bf16.msra.mxu0 %v238
    %270 = vmatprep.subr.bf16.mxu0 0
    %271 = vmatpush2.bf16.msra.mxu0 0
    %272 = vmatprep.subr.bf16.mxu0 0
    %273 = vmatpush2.bf16.msra.mxu0 0
    %274 = vmatprep.subr.bf16.mxu0 0
    %275 = vmatpush2.bf16.msra.mxu0 0
    %276 = vmatprep.subr.bf16.mxu0 0
    %277 = vmatpush2.bf16.msra.mxu0 0
    %278 = vmatprep.subr.bf16.mxu0 0
    %279 = vmatpush2.bf16.msra.mxu0 0
    %280 = vmatprep.subr.bf16.mxu0 0
    %281 = vmatpush2.bf16.msra.mxu0 0
    %282 = vmatprep.subr.bf16.mxu0 0
    %283 = vmatpush2.bf16.msra.mxu0 0
    %284 = vmatprep.subr.bf16.mxu0 0
    %285 = vmatpush2.bf16.msra.mxu0 0
    %286 = vmatprep.mubr.bf16.mxu0 0
    %287 = vmatmul.mubr.bf16.gmra.mxu0 %v182
    %v288 = vpop.f32.mrf.mxu0
    %v289 = vadd.f32 %v204, %v288
    %v290 = vpop.f32.mrf.mxu0
    %v291 = vpop.f32.mrf.mxu0
    %v292 = vpop.f32.mrf.mxu0
    %293 = vdwg.mxu0
    %v294 = vmax.f32 %v289, 0.0
    %v295 = vld [vmem:[%s5] sm:$0xff]
    %296 = vmatprep.subr.mxu0 0.0
    %297 = vmatpush1.xpose.msra.mxu0 0.0
    %298 = vmatprep.subr.mxu0 0.0
    %299 = vmatpush1.xpose.msra.mxu0 0.0
    %300 = vmatprep.subr.mxu0 0.0
    %301 = vmatpush1.xpose.msra.mxu0 0.0
    %302 = vmatprep.subr.mxu0 0.0
    %303 = vmatpush1.xpose.msra.mxu0 0.0
    %304 = vmatprep.subr.mxu0 0.0
    %305 = vmatpush1.xpose.msra.mxu0 0.0
    %306 = vmatprep.subr.mxu0 0.0
    %307 = vmatpush1.xpose.msra.mxu0 0.0
    %308 = vmatprep.subr.mxu0 0.0
    %309 = vmatpush1.xpose.msra.mxu0 0.0
    %310 = vmatprep.subr.mxu0 0.0
    %311 = vmatpush1.xpose.msra.mxu0 0.0
    %312 = vmatprep.subr.mxu0 0.0
    %313 = vmatpush1.xpose.msra.mxu0 0.0
    %314 = vmatprep.subr.mxu0 0.0
    %315 = vmatpush1.xpose.msra.mxu0 0.0
    %316 = vmatprep.subr.mxu0 0.0
    %317 = vmatpush1.xpose.msra.mxu0 0.0
    %318 = vmatprep.subr.mxu0 0.0
    %319 = vmatpush1.xpose.msra.mxu0 0.0
    %320 = vmatprep.subr.mxu0 0.0
    %321 = vmatpush1.xpose.msra.mxu0 0.0
    %322 = vmatprep.subr.mxu0 0.0
    %323 = vmatpush1.xpose.msra.mxu0 0.0
    %324 = vmatprep.subr.mxu0 0.0
    %325 = vmatpush1.xpose.msra.mxu0 0.0
    %326 = vmatprep.subr.mxu0 0.0
    %327 = vmatpush1.xpose.msra.mxu0 %v294
    %328 = vmatprep.subr.mxu0 0.0
    %329 = vmatpush2.xpose.msra.mxu0 0.0
    %330 = vmatprep.subr.mxu0 0.0
    %331 = vmatpush2.xpose.msra.mxu0 0.0
    %332 = vmatprep.subr.mxu0 0.0
    %333 = vmatpush2.xpose.msra.mxu0 0.0
    %334 = vmatprep.subr.mxu0 0.0
    %335 = vmatpush2.xpose.msra.mxu0 0.0
    %336 = vmatprep.subr.mxu0 0.0
    %337 = vmatpush2.xpose.msra.mxu0 0.0
    %338 = vmatprep.subr.mxu0 0.0
    %339 = vmatpush2.xpose.msra.mxu0 0.0
    %340 = vmatprep.subr.mxu0 0.0
    %341 = vmatpush2.xpose.msra.mxu0 0.0
    %342 = vmatprep.subr.mxu0 0.0
    %343 = vmatpush2.xpose.msra.mxu0 0.0
    %344 = vmatprep.subr.mxu0 0.0
    %345 = vmatpush2.xpose.msra.mxu0 0.0
    %346 = vmatprep.subr.mxu0 0.0
    %347 = vmatpush2.xpose.msra.mxu0 0.0
    %348 = vmatprep.subr.mxu0 0.0
    %349 = vmatpush2.xpose.msra.mxu0 0.0
    %350 = vmatprep.subr.mxu0 0.0
    %351 = vmatpush2.xpose.msra.mxu0 0.0
    %352 = vmatprep.subr.mxu0 0.0
    %353 = vmatpush2.xpose.msra.mxu0 0.0
    %354 = vmatprep.subr.mxu0 0.0
    %355 = vmatpush2.xpose.msra.mxu0 0.0
    %356 = vmatprep.subr.mxu0 0.0
    %357 = vmatpush2.xpose.msra.mxu0 0.0
    %358 = vmatprep.subr.mxu0 0.0
    %359 = vmatpush2.xpose.msra.mxu0 0.0
    %360 = vmatprep.mubr.f32.mxu0 0.0
    %361 = vmatmul.mubr.f32.gmra.mxu0 %v295
    %v362 = vpop.f32.mrf.mxu0
    %v363 = vadd.f32 0.0, %v362
    %v364 = vpop.f32.mrf.mxu0
    %365 = vdwg.mxu0
    %s366 = sld [smem:[#allocation2]]
    %v367 = vstv %s366
    %v368 = vadd.f32 %v363, %v367
    %v369 = vxor.u32 %v368, 2147483648
    %v370 = vmul.f32 %v369, 1.442695
    %v371 = vpow.pop %v370
    %v372 = vadd.f32 %v371, 1.0
    %v373 = vrcp.pop %v372
    %v374 = vmul.f32 1.0, %v373
    %vm375 = vcmask 57344
    %376 = vst.msk [vmem:[#allocation9] sm:$0x1] %vm375, %v374
    // Predicated region
    $region42: #{tpu_custom_call.1} parent=1 // pred_check
      _
    $region43: #{tpu_custom_call.1} parent=1 // pred_check_branch
      %378 = sbr.rel (0) target = $region45
    $region44: #{tpu_custom_call.1} parent=1 // pred_region
      %s380 = ssub.s32 16, 16
      %381 = vsyncadd [#allocation5], %s380
      %s383 = sshll.u32 [#allocation9], 4
      %s384 = int_to_ptr.vmem [resolvable:$true] %s383
      %386 = dma.vmem_to_hbm [thread:$0]  %s384, 16, %s7, [#allocation5]
    $region45: #{tpu_custom_call.1} parent=1 // pred_fallthru
      _
    // Predicated region
    $region46: #{tpu_custom_call.1} parent=1 // pred_check
      _
    $region47: #{tpu_custom_call.1} parent=1 // pred_check_branch
      %388 = sbr.rel (0) target = $region49
    $region48: #{tpu_custom_call.1} parent=1 // pred_region
      %389 = dma.done [#allocation5], 16
    $region49: #{tpu_custom_call.1} parent=1 // pred_fallthru
      _
    %390 = vsyncpa [#allocation4], 1
    %391 = vsyncpa [#allocation7], 1
    %392 = vsyncpa [#allocation5], 1

</llo_original>
